<compile_context>
chip_gen: v5e
topology: v5e:2x2
jax: 0.10.0
libtpu: 0.0.40
codegen_flags: <defaults>
</compile_context>

<pallas_src>
import jax
import jax.numpy as jnp
from jax.experimental import pallas as pl
from jax.experimental.pallas import tpu as pltpu


# ----------------------------------------------------------------------------
# Kernel 1: fused Linear + bidirectional input-gate projection.
#   x_ref : (tm, Hm)   time-major flattened input rows (row index = t*B + b)
#   wl_ref: (Hm, E)    W_lin^T
#   bl_ref: (1, E)     b_lin
#   wg_ref: (E, 8H)    [W_ih_f^T | W_ih_b^T]
#   bg_ref: (1, 8H)    [b_ih_f + b_hh_f | b_ih_b + b_hh_b]
#   o_ref : (tm, 8H)
# ----------------------------------------------------------------------------
def fused_projection_kernel(x_ref, wl_ref, bl_ref, wg_ref, bg_ref, o_ref):
    x_lin = jnp.dot(x_ref[...], wl_ref[...],
                    preferred_element_type=jnp.float32) + bl_ref[...]
    gx = jnp.dot(x_lin, wg_ref[...],
                 preferred_element_type=jnp.float32) + bg_ref[...]
    o_ref[...] = gx.astype(o_ref.dtype)


def fused_projection(x_flat, w_lin_t, b_lin, w_gates_t, b_gates, tm=256):
    M, Hm = x_flat.shape
    E = w_lin_t.shape[1]
    G2 = w_gates_t.shape[1]
    tm = M if M <= tm else tm          # full block at small M, tiled otherwise
    grid = (pl.cdiv(M, tm),)
    return pl.pallas_call(
        fused_projection_kernel,
        out_shape=jax.ShapeDtypeStruct((M, G2), jnp.float32),
        grid=grid,
        in_specs=[
            pl.BlockSpec((tm, Hm), lambda i: (i, 0)),
            pl.BlockSpec((Hm, E), lambda i: (0, 0)),
            pl.BlockSpec((1, E), lambda i: (0, 0)),
            pl.BlockSpec((E, G2), lambda i: (0, 0)),
            pl.BlockSpec((1, G2), lambda i: (0, 0)),
        ],
        out_specs=pl.BlockSpec((tm, G2), lambda i: (i, 0)),
        compiler_params=pltpu.CompilerParams(
            dimension_semantics=("parallel",)),
    )(x_flat, w_lin_t, b_lin.reshape(1, E), w_gates_t, b_gates.reshape(1, G2))


# ----------------------------------------------------------------------------
# Kernel 2: bidirectional LSTM recurrence (both directions in one loop).
#   gx_ref   : (T, B, 8H) time-major, [:, :, :4H]=forward gates, [:, :, 4H:]=backward
#              (b_ih and b_hh are already folded in)
#   whh_*_ref: (H, 4H)    W_hh^T per direction
#   of_ref   : (T, B, H)  forward hidden states
#   ob_ref   : (T, B, H)  backward hidden states (already un-reversed)
# PyTorch gate order: i, f, g, o.
# ----------------------------------------------------------------------------
def bidir_lstm_kernel(gx_ref, whh_f_ref, whh_b_ref, of_ref, ob_ref,
                      hf_scr, cf_scr, hb_scr, cb_scr):
    T = gx_ref.shape[0]
    H = hf_scr.shape[-1]
    G = 4 * H

    hf_scr[...] = jnp.zeros_like(hf_scr)
    cf_scr[...] = jnp.zeros_like(cf_scr)
    hb_scr[...] = jnp.zeros_like(hb_scr)
    cb_scr[...] = jnp.zeros_like(cb_scr)

    def cell(gates, c):
        i_g = jax.nn.sigmoid(gates[:, 0 * H:1 * H])
        f_g = jax.nn.sigmoid(gates[:, 1 * H:2 * H])
        g_g = jnp.tanh(gates[:, 2 * H:3 * H])
        o_g = jax.nn.sigmoid(gates[:, 3 * H:4 * H])
        c_new = f_g * c + i_g * g_g
        h_new = o_g * jnp.tanh(c_new)
        return h_new, c_new

    def step(t, carry):
        rt = T - 1 - t                       # in-kernel time reversal (no [::-1])
        gx_t = gx_ref[t]                     # (B, 8H) forward-time slice
        gx_rt = gx_ref[rt]                   # (B, 8H) backward-time slice

        gates_f = gx_t[:, 0:G] + jnp.dot(
            hf_scr[...], whh_f_ref[...], preferred_element_type=jnp.float32)
        gates_b = gx_rt[:, G:2 * G] + jnp.dot(
            hb_scr[...], whh_b_ref[...], preferred_element_type=jnp.float32)

        hf_new, cf_new = cell(gates_f, cf_scr[...])
        hb_new, cb_new = cell(gates_b, cb_scr[...])

        hf_scr[...] = hf_new
        cf_scr[...] = cf_new
        hb_scr[...] = hb_new
        cb_scr[...] = cb_new

        of_ref[t] = hf_new.astype(of_ref.dtype)
        ob_ref[rt] = hb_new.astype(ob_ref.dtype)
        return carry

    # Fully unroll (T is small here) so the LLO scheduler can interleave
    # adjacent steps' MXU / EUP work.
    jax.lax.fori_loop(0, T, step, 0, unroll=True)


def bidir_lstm(gx_tm, whh_f_t, whh_b_t):
    T, B, G2 = gx_tm.shape
    G = G2 // 2
    H = G // 4
    return pl.pallas_call(
        bidir_lstm_kernel,
        out_shape=(jax.ShapeDtypeStruct((T, B, H), jnp.float32),
                   jax.ShapeDtypeStruct((T, B, H), jnp.float32)),
        grid=(1,),
        in_specs=[
            pl.BlockSpec((T, B, G2), lambda i: (0, 0, 0)),
            pl.BlockSpec((H, G), lambda i: (0, 0)),
            pl.BlockSpec((H, G), lambda i: (0, 0)),
        ],
        out_specs=(pl.BlockSpec((T, B, H), lambda i: (0, 0, 0)),
                   pl.BlockSpec((T, B, H), lambda i: (0, 0, 0))),
        scratch_shapes=[
            pltpu.VMEM((B, H), jnp.float32),   # h forward
            pltpu.VMEM((B, H), jnp.float32),   # c forward
            pltpu.VMEM((B, H), jnp.float32),   # h backward
            pltpu.VMEM((B, H), jnp.float32),   # c backward
        ],
        compiler_params=pltpu.CompilerParams(
            dimension_semantics=("arbitrary",)),
    )(gx_tm, whh_f_t, whh_b_t)


# ----------------------------------------------------------------------------
# Module: Inference_Composition
# ----------------------------------------------------------------------------
class InferenceComposition:
    def __init__(self, embedding_dim, len_hidden_m, len_hidden, key):
        self.E = embedding_dim
        self.Hm = len_hidden_m
        self.H = len_hidden
        ks = jax.random.split(key, 10)

        def uinit(k, shape, fan):
            bound = 1.0 / jnp.sqrt(jnp.float32(fan))
            return jax.random.uniform(k, shape, jnp.float32, -bound, bound)

        # nn.Linear(len_hidden_m, embedding_dim)
        self.w_lin = uinit(ks[0], (embedding_dim, len_hidden_m), len_hidden_m)
        self.b_lin = uinit(ks[1], (embedding_dim,), len_hidden_m)

        # bidirectional LSTM, 1 layer (PyTorch parameter shapes)
        H = len_hidden
        self.w_ih_f = uinit(ks[2], (4 * H, embedding_dim), H)
        self.w_hh_f = uinit(ks[3], (4 * H, H), H)
        self.b_ih_f = uinit(ks[4], (4 * H,), H)
        self.b_hh_f = uinit(ks[5], (4 * H,), H)
        self.w_ih_b = uinit(ks[6], (4 * H, embedding_dim), H)
        self.w_hh_b = uinit(ks[7], (4 * H, H), H)
        self.b_ih_b = uinit(ks[8], (4 * H,), H)
        self.b_hh_b = uinit(ks[9], (4 * H,), H)

        # Precomputed fused views used by the kernels.
        self.w_lin_t = self.w_lin.T                                   # (Hm, E)
        self.w_gates_t = jnp.concatenate(
            [self.w_ih_f.T, self.w_ih_b.T], axis=1)                   # (E, 8H)
        self.b_gates = jnp.concatenate(
            [self.b_ih_f + self.b_hh_f, self.b_ih_b + self.b_hh_b])   # (8H,)
        self.whh_f_t = self.w_hh_f.T                                  # (H, 4H)
        self.whh_b_t = self.w_hh_b.T                                  # (H, 4H)

    def __call__(self, x):
        # x: (B, T, len_hidden_m), batch_first like the PyTorch module.
        B, T, Hm = x.shape
        assert Hm == self.Hm
        H = self.H

        # One small time-major transpose of the raw input; everything
        # downstream stays time-major (no big intermediate transposes).
        x_tm = jnp.transpose(x, (1, 0, 2)).reshape(T * B, Hm)

        # Linear + Dropout(eval=identity) + both input-gate projections, fused.
        gx = fused_projection(x_tm, self.w_lin_t, self.b_lin,
                              self.w_gates_t, self.b_gates)           # (T*B, 8H)
        gx_tm = gx.reshape(T, B, 8 * H)

        # Both LSTM directions in one Pallas recurrence kernel.
        h_f, h_b = bidir_lstm(gx_tm, self.whh_f_t, self.whh_b_t)      # (T,B,H) x2

        out_tm = jnp.concatenate([h_f, h_b], axis=-1)                 # (T, B, 2H)
        return jnp.transpose(out_tm, (1, 0, 2))                       # (B, T, 2H)


# ----------------------------------------------------------------------------
# Pure-JAX reference (matches PyTorch semantics) for a correctness check.
# ----------------------------------------------------------------------------
def reference_forward(m, x):
    B, T, _ = x.shape
    H = m.H
    hp = jax.lax.Precision.HIGHEST
    x_lin = jnp.einsum('bti,oi->bto', x, m.w_lin, precision=hp) + m.b_lin
    xs = jnp.transpose(x_lin, (1, 0, 2))   # (T, B, E)

    def run(w_ih, w_hh, b_ih, b_hh, seq):
        def step(carry, xt):
            h, c = carry
            gates = (jnp.dot(xt, w_ih.T, precision=hp) + b_ih
                     + jnp.dot(h, w_hh.T, precision=hp) + b_hh)
            i, f, g, o = jnp.split(gates, 4, axis=-1)
            c = jax.nn.sigmoid(f) * c + jax.nn.sigmoid(i) * jnp.tanh(g)
            h = jax.nn.sigmoid(o) * jnp.tanh(c)
            return (h, c), h
        h0 = jnp.zeros((B, H), jnp.float32)
        c0 = jnp.zeros((B, H), jnp.float32)
        _, hs = jax.lax.scan(step, (h0, c0), seq)
        return hs

    hf = run(m.w_ih_f, m.w_hh_f, m.b_ih_f, m.b_hh_f, xs)              # (T,B,H)
    hb = run(m.w_ih_b, m.w_hh_b, m.b_ih_b, m.b_hh_b, xs[::-1])[::-1]  # (T,B,H)
    return jnp.transpose(jnp.concatenate([hf, hb], axis=-1), (1, 0, 2))


if __name__ == "__main__":
    # Small shapes consistent with the module's forward: x: (batch, seq, len_hidden_m)
    B, T = 2, 8
    len_hidden_m = 32
    embedding_dim = 16
    len_hidden = 16

    key = jax.random.PRNGKey(0)
    k_param, k_x = jax.random.split(key)

    model = InferenceComposition(embedding_dim, len_hidden_m, len_hidden, k_param)
    x = jax.random.normal(k_x, (B, T, len_hidden_m), jnp.float32)

    out = jax.block_until_ready(model(x))
    assert out.shape == (B, T, 2 * len_hidden)
    assert bool(jnp.all(jnp.isfinite(out)))

    ref = jax.block_until_ready(reference_forward(model, x))
    max_err = float(jnp.max(jnp.abs(out - ref)))
    assert jnp.allclose(out, ref, rtol=2e-2, atol=2e-2), max_err

    print("KERNEL_OK")
</pallas_src>

<mosaic_0001>
module attributes {stable_mosaic.version = 11 : i64} {
  func.func @fused_projection_kernel(%arg0: i32, %arg1: memref<16x32xf32, #tpu.memory_space<vmem>>, %arg2: memref<32x16xf32, #tpu.memory_space<vmem>>, %arg3: memref<1x16xf32, #tpu.memory_space<vmem>>, %arg4: memref<16x128xf32, #tpu.memory_space<vmem>>, %arg5: memref<1x128xf32, #tpu.memory_space<vmem>>, %arg6: memref<16x128xf32, #tpu.memory_space<vmem>>) attributes {dimension_semantics = [#tpu.dimension_semantics<parallel>], iteration_bounds = array<i64: 1>, scalar_prefetch = 0 : i64, scratch_operands = 0 : i64, tpu.core_type = #tpu.core_type<tc>, window_params = [{transform_indices = @transform_0, window_bounds = array<i64: 16, 32>}, {pipeline_mode = #tpu.pipeline_mode<synchronous>, transform_indices = @transform_1, window_bounds = array<i64: 32, 16>}, {pipeline_mode = #tpu.pipeline_mode<synchronous>, transform_indices = @transform_2, window_bounds = array<i64: 1, 16>}, {pipeline_mode = #tpu.pipeline_mode<synchronous>, transform_indices = @transform_3, window_bounds = array<i64: 16, 128>}, {pipeline_mode = #tpu.pipeline_mode<synchronous>, transform_indices = @transform_4, window_bounds = array<i64: 1, 128>}, {transform_indices = @transform_5, window_bounds = array<i64: 16, 128>}]} {
    %c0 = arith.constant 0 : index
    %c0_0 = arith.constant 0 : index
    %0 = vector.load %arg1[%c0, %c0_0] : memref<16x32xf32, #tpu.memory_space<vmem>>, vector<16x32xf32>
    %c0_1 = arith.constant 0 : index
    %c0_2 = arith.constant 0 : index
    %1 = vector.load %arg2[%c0_1, %c0_2] : memref<32x16xf32, #tpu.memory_space<vmem>>, vector<32x16xf32>
    %cst = arith.constant dense<0.000000e+00> : vector<16x16xf32>
    %2 = tpu.matmul %0, %1, %cst {dimension_numbers = #tpu.dot_dimension_numbers<[1], [0], [0], [1], [0, 0, 1, 1], [], []>} : vector<16x32xf32>, vector<32x16xf32>, vector<16x16xf32> -> vector<16x16xf32>
    %c0_3 = arith.constant 0 : index
    %c0_4 = arith.constant 0 : index
    %3 = vector.load %arg3[%c0_3, %c0_4] : memref<1x16xf32, #tpu.memory_space<vmem>>, vector<1x16xf32>
    %4 = vector.broadcast %3 : vector<1x16xf32> to vector<16x16xf32>
    %5 = arith.addf %2, %4 : vector<16x16xf32>
    %c0_5 = arith.constant 0 : index
    %c0_6 = arith.constant 0 : index
    %6 = vector.load %arg4[%c0_5, %c0_6] : memref<16x128xf32, #tpu.memory_space<vmem>>, vector<16x128xf32>
    %cst_7 = arith.constant dense<0.000000e+00> : vector<16x128xf32>
    %7 = tpu.matmul %5, %6, %cst_7 {dimension_numbers = #tpu.dot_dimension_numbers<[1], [0], [0], [1], [0, 0, 1, 1], [], []>} : vector<16x16xf32>, vector<16x128xf32>, vector<16x128xf32> -> vector<16x128xf32>
    %c0_8 = arith.constant 0 : index
    %c0_9 = arith.constant 0 : index
    %8 = vector.load %arg5[%c0_8, %c0_9] : memref<1x128xf32, #tpu.memory_space<vmem>>, vector<1x128xf32>
    %9 = vector.broadcast %8 : vector<1x128xf32> to vector<16x128xf32>
    %10 = arith.addf %7, %9 : vector<16x128xf32>
    %c0_10 = arith.constant 0 : index
    %c0_11 = arith.constant 0 : index
    %11 = vector.load %arg6[%c0_10, %c0_11] : memref<16x128xf32, #tpu.memory_space<vmem>>, vector<16x128xf32>
    tpu.vector_store %arg6[%c0_10, %c0_11], %10 {strides = array<i32>} : memref<16x128xf32, #tpu.memory_space<vmem>>, vector<16x128xf32>,
    return
  }
  func.func @transform_0(%arg0: i32) -> (i32, i32) {
    %c0_i32 = arith.constant 0 : i32
    %c0_i32_0 = arith.constant 0 : i32
    return %arg0, %c0_i32 : i32, i32
  }
  func.func @transform_1(%arg0: i32) -> (i32, i32) {
    %c0_i32 = arith.constant 0 : i32
    %c0_i32_0 = arith.constant 0 : i32
    %c0_i32_1 = arith.constant 0 : i32
    return %c0_i32, %c0_i32_0 : i32, i32
  }
  func.func @transform_2(%arg0: i32) -> (i32, i32) {
    %c0_i32 = arith.constant 0 : i32
    %c0_i32_0 = arith.constant 0 : i32
    %c0_i32_1 = arith.constant 0 : i32
    return %c0_i32, %c0_i32_0 : i32, i32
  }
  func.func @transform_3(%arg0: i32) -> (i32, i32) {
    %c0_i32 = arith.constant 0 : i32
    %c0_i32_0 = arith.constant 0 : i32
    %c0_i32_1 = arith.constant 0 : i32
    return %c0_i32, %c0_i32_0 : i32, i32
  }
  func.func @transform_4(%arg0: i32) -> (i32, i32) {
    %c0_i32 = arith.constant 0 : i32
    %c0_i32_0 = arith.constant 0 : i32
    %c0_i32_1 = arith.constant 0 : i32
    return %c0_i32, %c0_i32_0 : i32, i32
  }
  func.func @transform_5(%arg0: i32) -> (i32, i32) {
    %c0_i32 = arith.constant 0 : i32
    %c0_i32_0 = arith.constant 0 : i32
    return %arg0, %c0_i32 : i32, i32
  }
}

</mosaic_0001>

<llo_original>
// kernel: tpu_custom_call.1
$region0: #{tpu_custom_call.1}
  #allocation0 [shape = 'u32[]', space=smem, size = 0x4, offset = 0x4, fixed_abs, tag = 'smem constant byte address 0x4 - core index']
  #allocation1 [shape = 'u32[72,128]{1,0:T(1,128)}', space=vmem, size = 0x9000, scoped, tag = 'internal scratch']
  %s0 = inlined_call_operand.vmem [shape: f32[16,32], index: 0, kind: input, shape index: {}]
  %s1 = inlined_call_operand.vmem [shape: f32[32,16], index: 1, kind: input, shape index: {}]
  %s2 = inlined_call_operand.vmem [shape: f32[1,16], index: 2, kind: input, shape index: {}]
  %s3 = inlined_call_operand.vmem [shape: f32[16,128], index: 3, kind: input, shape index: {}]
  %s4 = inlined_call_operand.vmem [shape: f32[1,128], index: 4, kind: input, shape index: {}]
  %s5 = inlined_call_operand.hbm [shape: f32[16,128], index: 5, kind: output, shape index: {}]
  %s6 = sld [smem:[#allocation0]]
  $region30: #{tpu_custom_call.1} parent=0
    _
  %s8 = ssub.s32 1, %s6
  %s9 = scalar_select 0, %s8, %s6
  $region1: #{tpu_custom_call.1} parent=0
    #allocation2 [shape = 'u8[8192]{0}', space=vmem, size = 0x2000, scoped, tag = 'output window, operand 0, single buffered']
    #allocation3 [shape = 's32[1]{0}', space=sflag, size = 0x4, scoped, tag = 'scoped memory for tpu_custom_call.1']
    %10 = vsyncpa [#allocation3], 0
    // Predicated region
    $region2: #{tpu_custom_call.1} parent=1 // pred_check
      _
    $region3: #{tpu_custom_call.1} parent=1 // pred_check_branch
      %12 = sbr.rel (0) target = $region5
    $region4: #{tpu_custom_call.1} parent=1 // pred_region
      _
    $region5: #{tpu_custom_call.1} parent=1 // pred_fallthru
      _
    // Predicated region
    $region6: #{tpu_custom_call.1} parent=1 // pred_check
      _
    $region7: #{tpu_custom_call.1} parent=1 // pred_check_branch
      %14 = sbr.rel (0) target = $region9
    $region8: #{tpu_custom_call.1} parent=1 // pred_region
      _
    $region9: #{tpu_custom_call.1} parent=1 // pred_fallthru
      _
    // Predicated region
    $region10: #{tpu_custom_call.1} parent=1 // pred_check
      _
    $region11: #{tpu_custom_call.1} parent=1 // pred_check_branch
      %16 = sbr.rel (0) target = $region13
    $region12: #{tpu_custom_call.1} parent=1 // pred_region
      _
    $region13: #{tpu_custom_call.1} parent=1 // pred_fallthru
      _
    // Predicated region
    $region14: #{tpu_custom_call.1} parent=1 // pred_check
      _
    $region15: #{tpu_custom_call.1} parent=1 // pred_check_branch
      %18 = sbr.rel (0) target = $region17
    $region16: #{tpu_custom_call.1} parent=1 // pred_region
      _
    $region17: #{tpu_custom_call.1} parent=1 // pred_fallthru
      _
    // Predicated region
    $region18: #{tpu_custom_call.1} parent=1 // pred_check
      _
    $region19: #{tpu_custom_call.1} parent=1 // pred_check_branch
      %20 = sbr.rel (0) target = $region21
    $region20: #{tpu_custom_call.1} parent=1 // pred_region
      _
    $region21: #{tpu_custom_call.1} parent=1 // pred_fallthru
      _
    %v21 = vld [vmem:[%s0] sm:$0xff]
    %v22 = vld [vmem:[%s0 + $0x8] sm:$0xff]
    %v23 = vld [vmem:[%s1] sm:$0xff]
    %v24 = vld [vmem:[%s1 + $0x8] sm:$0xff]
    %v25 = vld [vmem:[%s1 + $0x10] sm:$0xff]
    %v26 = vld [vmem:[%s1 + $0x18] sm:$0xff]
    %v27 = vld [vmem:[%s2] sm:$0x1]
    %v29 = vperm.slane %v27, 0
    %vm31 = vcmask 261120
    %v33 = vsel %vm31, %v21, 0
    %v36 = vsel %vm31, %v22, 0
    %38 = vmatpush.msra.mxu0 0.0
    %39 = vmatpush.msra.mxu0 0.0
    %40 = vmatpush.msra.mxu0 0.0
    %41 = vmatpush.msra.mxu0 0.0
    %42 = vmatpush.msra.mxu0 0.0
    %43 = vmatpush.msra.mxu0 0.0
    %44 = vmatpush.msra.mxu0 0.0
    %45 = vmatpush.msra.mxu0 0.0
    %46 = vmatpush.msra.mxu0 0.0
    %47 = vmatpush.msra.mxu0 0.0
    %48 = vmatpush.msra.mxu0 0.0
    %49 = vmatpush.msra.mxu0 0.0
    %50 = vmatpush.msra.mxu0 %v26
    %51 = vmatpush.msra.mxu0 %v25
    %52 = vmatpush.msra.mxu0 %v24
    %53 = vmatpush.msra.mxu0 %v23
    %54 = vmatmul.f32.gmra.mxu0 %v33
    %v55 = vpop.f32.mrf.mxu0
    %v56 = vadd.f32 %v29, %v55
    %57 = vmatmul.f32.gmra.mxu0 %v36
    %v58 = vpop.f32.mrf.mxu0
    %v59 = vadd.f32 %v29, %v58
    %60 = vdwg.mxu0
    %v61 = vld [vmem:[%s3] sm:$0xff]
    %v62 = vld [vmem:[%s3 + $0x8] sm:$0xff]
    %v63 = vld [vmem:[%s4] sm:$0x1]
    %v65 = vperm.slane %v63, 0
    %vm67 = vcmask 130048
    %v69 = vsel %vm67, %v56, 0
    %v72 = vsel %vm67, %v59, 0
    %74 = vmatpush.msra.mxu0 0.0
    %75 = vmatpush.msra.mxu0 0.0
    %76 = vmatpush.msra.mxu0 0.0
    %77 = vmatpush.msra.mxu0 0.0
    %78 = vmatpush.msra.mxu0 0.0
    %79 = vmatpush.msra.mxu0 0.0
    %80 = vmatpush.msra.mxu0 0.0
    %81 = vmatpush.msra.mxu0 0.0
    %82 = vmatpush.msra.mxu0 0.0
    %83 = vmatpush.msra.mxu0 0.0
    %84 = vmatpush.msra.mxu0 0.0
    %85 = vmatpush.msra.mxu0 0.0
    %86 = vmatpush.msra.mxu0 0.0
    %87 = vmatpush.msra.mxu0 0.0
    %88 = vmatpush.msra.mxu0 %v62
    %89 = vmatpush.msra.mxu0 %v61
    %90 = vmatmul.f32.gmra.mxu0 %v69
    %v91 = vpop.f32.mrf.mxu0
    %v92 = vadd.f32 %v65, %v91
    %93 = vmatmul.f32.gmra.mxu0 %v72
    %v94 = vpop.f32.mrf.mxu0
    %v95 = vadd.f32 %v65, %v94
    %96 = vdwg.mxu0
    %97 = vst [vmem:[#allocation2] sm:$0xff] %v92
    %98 = vst [vmem:[#allocation2 + $0x8] sm:$0xff] %v95
    // Predicated region
    $region22: #{tpu_custom_call.1} parent=1 // pred_check
      _
    $region23: #{tpu_custom_call.1} parent=1 // pred_check_branch
      %100 = sbr.rel (0) target = $region25
    $region24: #{tpu_custom_call.1} parent=1 // pred_region
      %102 = vsyncadd [#allocation3], 0
      %s103 = sshll.u32 [#allocation2], 4
      %s104 = int_to_ptr.vmem [resolvable:$true] %s103
      %s105 = sshll.u32 %s5, 4
      %s106 = int_to_ptr.hbm [resolvable:$true] %s105
      %111 = dma.vmem_to_hbm [thread:$0]  %s104, 256, %s106, [#allocation3], 128, 128, 8
    $region25: #{tpu_custom_call.1} parent=1 // pred_fallthru
      _
    // Predicated region
    $region26: #{tpu_custom_call.1} parent=1 // pred_check
      _
    $region27: #{tpu_custom_call.1} parent=1 // pred_check_branch
      %113 = sbr.rel (0) target = $region29
    $region28: #{tpu_custom_call.1} parent=1 // pred_region
      %115 = dma.done [#allocation3], 256
    $region29: #{tpu_custom_call.1} parent=1 // pred_fallthru
      _
    %116 = vsyncpa [#allocation3], 1

</llo_original>
